<compile_context>
chip_gen: v5e
topology: v5e:2x2
jax: 0.10.0
libtpu: 0.0.40
codegen_flags: <defaults>
</compile_context>

<pallas_src>
import functools
import math

import jax
import jax.numpy as jnp
from jax.experimental import pallas as pl
from jax.experimental.pallas import tpu as pltpu


_NEG_BIG = -1e30  # mask for padded class lanes (finite; exp() underflows to 0)


def _round_up(x, m):
    return ((x + m - 1) // m) * m


def _vmem_limit_bytes():
    # v5e/v6e: 128 MiB physical VMEM (raise the 32 MiB scoped default);
    # v7x: only 64 MiB physical -> cap at ~3/4 of whatever the chip reports.
    try:
        cap = pltpu.get_tpu_info().vmem_capacity_bytes
        return int(min(96 * 1024 * 1024, (cap * 3) // 4))
    except Exception:
        return 48 * 1024 * 1024  # safe on every current TPU generation


def _masked_log_softmax(z, num_valid):
    """log_softmax over axis 1, ignoring lane-padding columns >= num_valid."""
    col = jax.lax.broadcasted_iota(jnp.int32, z.shape, dimension=1)
    z = jnp.where(col < num_valid, z, _NEG_BIG)
    m = jnp.max(z, axis=1, keepdims=True)
    s = z - m
    lse = jnp.log(jnp.sum(jnp.exp(s), axis=1, keepdims=True))
    return s - lse


# ---------------------------------------------------------------------------
# Kernels
# ---------------------------------------------------------------------------

def gcn_fused_kernel(a_ref, x_ref, w1_ref, b1_ref, w2_ref, b2_ref, o_ref, *,
                     num_classes):
    """Whole graph in one block: both GCNConv layers; hw2 never leaves VMEM."""
    ax = jnp.dot(a_ref[...], x_ref[...], preferred_element_type=jnp.float32)
    h = jnp.dot(ax, w1_ref[...], preferred_element_type=jnp.float32) + b1_ref[...]
    h = jnp.maximum(h, 0.0)                                   # ReLU
    # F.dropout(x, training=self.training): eval-mode forward is the identity.
    # TODO(synk): training-mode dropout (pltpu.prng_* mask + 1/(1-p) scale) not emitted.
    hw2 = jnp.dot(h, w2_ref[...], preferred_element_type=jnp.float32)
    z = jnp.dot(a_ref[...], hw2.astype(jnp.bfloat16),
                preferred_element_type=jnp.float32) + b2_ref[...]
    o_ref[...] = _masked_log_softmax(z, num_classes)


def gcn_layer1_kernel(a_ref, x_ref, w1_ref, b1_ref, w2_ref, hw2_ref, ax_acc):
    """Row/K tile of  hw2 = relu((A_hat @ x) @ W1 + b1) @ W2  (K = node axis)."""
    k = pl.program_id(1)

    @pl.when(k == 0)
    def _():
        ax_acc[...] = jnp.zeros_like(ax_acc)

    ax_acc[...] += jnp.dot(a_ref[...], x_ref[...],
                           preferred_element_type=jnp.float32)

    @pl.when(k == pl.num_programs(1) - 1)
    def _():
        h = jnp.dot(ax_acc[...], w1_ref[...],
                    preferred_element_type=jnp.float32) + b1_ref[...]
        h = jnp.maximum(h, 0.0)
        # eval-mode dropout == identity (see fused kernel).
        hw2 = jnp.dot(h, w2_ref[...], preferred_element_type=jnp.float32)
        hw2_ref[...] = hw2.astype(hw2_ref.dtype)


def gcn_layer2_kernel(a_ref, hw2_ref, b2_ref, o_ref, z_acc, *, num_classes):
    """Row/K tile of  out = log_softmax(A_hat @ hw2 + b2, axis=1)."""
    k = pl.program_id(1)

    @pl.when(k == 0)
    def _():
        z_acc[...] = jnp.zeros_like(z_acc)

    z_acc[...] += jnp.dot(a_ref[...], hw2_ref[...],
                          preferred_element_type=jnp.float32)

    @pl.when(k == pl.num_programs(1) - 1)
    def _():
        o_ref[...] = _masked_log_softmax(z_acc[...] + b2_ref[...], num_classes)


# ---------------------------------------------------------------------------
# Wrapper
# ---------------------------------------------------------------------------

def gcn_forward(a_hat, x, w1, b1, w2, b2, *, tm=None, tk=None):
    n, f_in = x.shape
    hid = w1.shape[1]
    c = w2.shape[1]

    # Pad the class axis to a full 128-lane width: lane-dense hw2 carry and
    # output stores; padded logits are masked before the softmax reductions.
    c_pad = _round_up(max(c, 128), 128)
    w1f = w1.astype(jnp.float32)
    b1r = b1.astype(jnp.float32).reshape(1, hid)
    w2p = jnp.pad(w2.astype(jnp.float32), ((0, 0), (0, c_pad - c)))
    b2p = jnp.pad(b2.astype(jnp.float32).reshape(1, c), ((0, 0), (0, c_pad - c)))

    vmem_limit = _vmem_limit_bytes()
    # TODO(synk): on v7x stream A_hat as fp8 (e4m3), on v5e/v6e as int8 with a
    # scale folded into the f32 epilogue -- halves the dominant HBM stream but
    # needs an explicit accuracy check, so bf16 stays the default here.
    # TODO(synk): for genuinely sparse graphs, replace dense A_hat with a CSR
    # gather (PrefetchScalarGridSpec + manual DMA) or block-skip all-zero tiles.

    fused = tm is None and tk is None and n <= 256
    if fused:
        # Single-block regime: one pallas_call, A_hat read once, no hw2 carry.
        a_bf = a_hat.astype(jnp.bfloat16)
        x_bf = x.astype(jnp.bfloat16)
        cost = pl.CostEstimate(
            flops=2 * (n * n * f_in + n * f_in * hid + n * hid * c_pad + n * n * c_pad),
            transcendentals=n * (c_pad + 1),
            bytes_accessed=(n * n + n * f_in) * 2 + n * c_pad * 4
            + (f_in * hid + hid + hid * c_pad + c_pad) * 4,
        )
        out = pl.pallas_call(
            functools.partial(gcn_fused_kernel, num_classes=c),
            out_shape=jax.ShapeDtypeStruct((n, c_pad), jnp.float32),
            compiler_params=pltpu.CompilerParams(vmem_limit_bytes=vmem_limit),
            cost_estimate=cost,
        )(a_bf, x_bf, w1f, b1r, w2p, b2p)
        return out[:, :c]

    # ---- Row-tiled + K-tiled two-stage path --------------------------------
    if tm is None:
        tm = 256 if n <= 4096 else 512      # >=2 row blocks -> v7x megacore
    if tk is None:
        best = None
        for cand in (2048, 1024, 512, 256):  # (tm, tk) bf16 blocks bound VMEM
            waste = _round_up(n, math.lcm(tm, cand)) - n
            if best is None or waste < best[0]:
                best = (waste, cand)
        tk = best[1]
    n_pad = _round_up(n, math.lcm(tm, tk))

    if n_pad != n:  # zero rows/cols: no contribution to real rows, sliced off
        a_hat = jnp.pad(a_hat, ((0, n_pad - n), (0, n_pad - n)))
        x = jnp.pad(x, ((0, n_pad - n), (0, 0)))
    a_bf = a_hat.astype(jnp.bfloat16)
    x_bf = x.astype(jnp.bfloat16)

    grid = (n_pad // tm, n_pad // tk)       # reduction (K) axis last
    cparams = pltpu.CompilerParams(
        dimension_semantics=("parallel", "arbitrary"),
        vmem_limit_bytes=vmem_limit,
    )
    # NOTE: if a trace shows exposed A_hat DMA at each grid step, sweep
    # pipeline_mode=pl.Buffered(3) on the A_hat BlockSpec.

    cost1 = pl.CostEstimate(
        flops=2 * (n_pad * n_pad * f_in + n_pad * f_in * hid + n_pad * hid * c_pad),
        transcendentals=0,
        bytes_accessed=(n_pad * n_pad + n_pad * f_in + n_pad * c_pad) * 2
        + (f_in * hid + hid + hid * c_pad) * 4,
    )
    hw2 = pl.pallas_call(
        gcn_layer1_kernel,
        grid=grid,
        in_specs=[
            pl.BlockSpec((tm, tk), lambda i, k: (i, k)),      # A_hat tile (bf16)
            pl.BlockSpec((tk, f_in), lambda i, k: (k, 0)),    # x K-slice (bf16)
            pl.BlockSpec((f_in, hid), lambda i, k: (0, 0)),   # W1 (resident)
            pl.BlockSpec((1, hid), lambda i, k: (0, 0)),      # b1
            pl.BlockSpec((hid, c_pad), lambda i, k: (0, 0)),  # W2 (lane-padded)
        ],
        out_specs=pl.BlockSpec((tm, c_pad), lambda i, k: (i, 0)),
        out_shape=jax.ShapeDtypeStruct((n_pad, c_pad), jnp.bfloat16),
        scratch_shapes=[pltpu.VMEM((tm, f_in), jnp.float32)],
        compiler_params=cparams,
        cost_estimate=cost1,
    )(a_bf, x_bf, w1f, b1r, w2p)

    cost2 = pl.CostEstimate(
        flops=2 * n_pad * n_pad * c_pad,
        transcendentals=n_pad * (c_pad + 1),
        bytes_accessed=(n_pad * n_pad + n_pad * c_pad) * 2
        + (c_pad + n_pad * c_pad) * 4,
    )
    out = pl.pallas_call(
        functools.partial(gcn_layer2_kernel, num_classes=c),
        grid=grid,
        in_specs=[
            pl.BlockSpec((tm, tk), lambda i, k: (i, k)),      # A_hat tile (bf16)
            pl.BlockSpec((tk, c_pad), lambda i, k: (k, 0)),   # hw2 K-slice (bf16)
            pl.BlockSpec((1, c_pad), lambda i, k: (0, 0)),    # b2 (lane-padded)
        ],
        out_specs=pl.BlockSpec((tm, c_pad), lambda i, k: (i, 0)),
        out_shape=jax.ShapeDtypeStruct((n_pad, c_pad), jnp.float32),
        scratch_shapes=[pltpu.VMEM((tm, c_pad), jnp.float32)],
        compiler_params=cparams,
        cost_estimate=cost2,
    )(a_bf, hw2, b2p)

    # Lane-sparse (N, C) view only at the final XLA boundary.
    return out[:n, :c]


# ---------------------------------------------------------------------------
# Plain-JAX glue / reference
# ---------------------------------------------------------------------------

def build_normalized_adjacency(edge_index, num_nodes):
    """Dense GCN normalization: D^{-1/2} (A + I) D^{-1/2}   (glue, plain JAX)."""
    src, dst = edge_index[0], edge_index[1]
    # .add matches PyG's scatter-sum of duplicate edge weights.
    a = jnp.zeros((num_nodes, num_nodes), jnp.float32).at[dst, src].add(1.0)
    a = a + jnp.eye(num_nodes, dtype=jnp.float32)             # add self-loops
    deg = a.sum(axis=1)
    dinv = jnp.where(deg > 0, 1.0 / jnp.sqrt(deg), 0.0)
    return dinv[:, None] * a * dinv[None, :]


def glorot(key, fan_in, fan_out):
    lim = jnp.sqrt(6.0 / (fan_in + fan_out))
    return jax.random.uniform(key, (fan_in, fan_out), jnp.float32, -lim, lim)


def gcn_reference(a_hat, x, w1, b1, w2, b2):
    """Plain-JAX reference mirroring the kernel's bf16 operand rounding."""
    hp = jax.lax.Precision.HIGHEST
    a = a_hat.astype(jnp.bfloat16).astype(jnp.float32)
    xf = x.astype(jnp.bfloat16).astype(jnp.float32)
    ax = jnp.dot(a, xf, precision=hp)
    h = jnp.maximum(jnp.dot(ax, w1, precision=hp) + b1, 0.0)
    hw2 = jnp.dot(h, w2, precision=hp).astype(jnp.bfloat16).astype(jnp.float32)
    z = jnp.dot(a, hw2, precision=hp) + b2
    return jax.nn.log_softmax(z, axis=1)


if __name__ == "__main__":
    # Consistent with the module: data.num_node_features = 4, hidden = 32,
    # num_classes = int(data.y.max() + 2) = 4  (y.max() == 2).
    N, F_IN, HID, NUM_CLASSES = 64, 4, 32, 4

    key = jax.random.PRNGKey(0)
    k_x, k_w1, k_w2, k_x2 = jax.random.split(key, 4)

    def ring_edges(num_nodes):
        s = jnp.arange(num_nodes, dtype=jnp.int32)
        d = (s + 1) % num_nodes
        return jnp.stack([jnp.concatenate([s, d]), jnp.concatenate([d, s])], axis=0)

    x = jax.random.normal(k_x, (N, F_IN), dtype=jnp.float32)
    edge_index = ring_edges(N)
    a_hat = build_normalized_adjacency(edge_index, N)

    # GCNConv parameters: glorot weight, zero bias.
    w1 = glorot(k_w1, F_IN, HID)
    b1 = jnp.zeros((1, HID), jnp.float32)
    w2 = glorot(k_w2, HID, NUM_CLASSES)
    b2 = jnp.zeros((1, NUM_CLASSES), jnp.float32)

    # --- demo size: fused single-block path ---------------------------------
    out = jax.block_until_ready(gcn_forward(a_hat, x, w1, b1, w2, b2))
    ref = gcn_reference(a_hat, x, w1, b1, w2, b2)
    assert out.shape == (N, NUM_CLASSES)
    assert bool(jnp.all(jnp.isfinite(out)))
    assert float(jnp.max(jnp.abs(out - ref))) < 3e-2, "fused path mismatch"

    # --- larger size: exercise the row-tiled + K-tiled two-stage path -------
    N2 = 512
    x2 = jax.random.normal(k_x2, (N2, F_IN), dtype=jnp.float32)
    a_hat2 = build_normalized_adjacency(ring_edges(N2), N2)
    out2 = jax.block_until_ready(
        gcn_forward(a_hat2, x2, w1, b1, w2, b2, tm=256, tk=256))
    ref2 = gcn_reference(a_hat2, x2, w1, b1, w2, b2)
    assert out2.shape == (N2, NUM_CLASSES)
    assert bool(jnp.all(jnp.isfinite(out2)))
    assert float(jnp.max(jnp.abs(out2 - ref2))) < 3e-2, "tiled path mismatch"

    print("KERNEL_OK")
</pallas_src>

<mosaic_0001>
module attributes {stable_mosaic.version = 11 : i64} {
  func.func @gcn_fused_kernel(%arg0: memref<64x64xbf16, #tpu.memory_space<vmem>>, %arg1: memref<64x4xbf16, #tpu.memory_space<vmem>>, %arg2: memref<4x32xf32, #tpu.memory_space<vmem>>, %arg3: memref<1x32xf32, #tpu.memory_space<vmem>>, %arg4: memref<32x128xf32, #tpu.memory_space<vmem>>, %arg5: memref<1x128xf32, #tpu.memory_space<vmem>>, %arg6: memref<64x128xf32, #tpu.memory_space<vmem>>) attributes {dimension_semantics = [], scalar_prefetch = 0 : i64, scratch_operands = 0 : i64, tpu.core_type = #tpu.core_type<tc>} {
    %c0 = arith.constant 0 : index
    %c0_0 = arith.constant 0 : index
    %0 = vector.load %arg0[%c0, %c0_0] : memref<64x64xbf16, #tpu.memory_space<vmem>>, vector<64x64xbf16>
    %c0_1 = arith.constant 0 : index
    %c0_2 = arith.constant 0 : index
    %1 = vector.load %arg1[%c0_1, %c0_2] : memref<64x4xbf16, #tpu.memory_space<vmem>>, vector<64x4xbf16>
    %cst = arith.constant dense<0.000000e+00> : vector<64x4xf32>
    %2 = tpu.matmul %0, %1, %cst {dimension_numbers = #tpu.dot_dimension_numbers<[1], [0], [0], [1], [0, 0, 1, 1], [], []>} : vector<64x64xbf16>, vector<64x4xbf16>, vector<64x4xf32> -> vector<64x4xf32>
    %c0_3 = arith.constant 0 : index
    %c0_4 = arith.constant 0 : index
    %3 = vector.load %arg2[%c0_3, %c0_4] : memref<4x32xf32, #tpu.memory_space<vmem>>, vector<4x32xf32>
    %cst_5 = arith.constant dense<0.000000e+00> : vector<64x32xf32>
    %4 = tpu.matmul %2, %3, %cst_5 {dimension_numbers = #tpu.dot_dimension_numbers<[1], [0], [0], [1], [0, 0, 1, 1], [], []>} : vector<64x4xf32>, vector<4x32xf32>, vector<64x32xf32> -> vector<64x32xf32>
    %c0_6 = arith.constant 0 : index
    %c0_7 = arith.constant 0 : index
    %5 = vector.load %arg3[%c0_6, %c0_7] : memref<1x32xf32, #tpu.memory_space<vmem>>, vector<1x32xf32>
    %6 = vector.broadcast %5 : vector<1x32xf32> to vector<64x32xf32>
    %7 = arith.addf %4, %6 : vector<64x32xf32>
    %cst_8 = arith.constant 0.000000e+00 : f32
    %8 = vector.broadcast %cst_8 : f32 to vector<64x32xf32>
    %9 = arith.maximumf %7, %8 : vector<64x32xf32>
    %c0_9 = arith.constant 0 : index
    %c0_10 = arith.constant 0 : index
    %10 = vector.load %arg4[%c0_9, %c0_10] : memref<32x128xf32, #tpu.memory_space<vmem>>, vector<32x128xf32>
    %cst_11 = arith.constant dense<0.000000e+00> : vector<64x128xf32>
    %11 = tpu.matmul %9, %10, %cst_11 {dimension_numbers = #tpu.dot_dimension_numbers<[1], [0], [0], [1], [0, 0, 1, 1], [], []>} : vector<64x32xf32>, vector<32x128xf32>, vector<64x128xf32> -> vector<64x128xf32>
    %c0_12 = arith.constant 0 : index
    %c0_13 = arith.constant 0 : index
    %12 = vector.load %arg0[%c0_12, %c0_13] : memref<64x64xbf16, #tpu.memory_space<vmem>>, vector<64x64xbf16>
    %13 = arith.truncf %11 : vector<64x128xf32> to vector<64x128xbf16>
    %cst_14 = arith.constant dense<0.000000e+00> : vector<64x128xf32>
    %14 = tpu.matmul %12, %13, %cst_14 {dimension_numbers = #tpu.dot_dimension_numbers<[1], [0], [0], [1], [0, 0, 1, 1], [], []>} : vector<64x64xbf16>, vector<64x128xbf16>, vector<64x128xf32> -> vector<64x128xf32>
    %c0_15 = arith.constant 0 : index
    %c0_16 = arith.constant 0 : index
    %15 = vector.load %arg5[%c0_15, %c0_16] : memref<1x128xf32, #tpu.memory_space<vmem>>, vector<1x128xf32>
    %16 = vector.broadcast %15 : vector<1x128xf32> to vector<64x128xf32>
    %17 = arith.addf %14, %16 : vector<64x128xf32>
    %18 = tpu.iota {dimensions = array<i32: 1>} : vector<64x128xi32>
    %c4_i32 = arith.constant 4 : i32
    %19 = vector.broadcast %c4_i32 : i32 to vector<64x128xi32>
    %20 = arith.cmpi slt, %18, %19 : vector<64x128xi32>
    %cst_17 = arith.constant -1.000000e+30 : f32
    %21 = vector.broadcast %cst_17 : f32 to vector<64x128xf32>
    %22 = arith.select %20, %17, %21 : vector<64x128xi1>, vector<64x128xf32>
    %cst_18 = arith.constant dense<0xFF800000> : vector<64xf32>
    %23 = vector.multi_reduction <maximumf>, %22, %cst_18 [1] : vector<64x128xf32> to vector<64xf32>
    %24 = vector.shape_cast %23 : vector<64xf32> to vector<64x1xf32>
    %25 = vector.broadcast %24 : vector<64x1xf32> to vector<64x128xf32>
    %26 = arith.subf %22, %25 : vector<64x128xf32>
    %27 = math.exp %26 : vector<64x128xf32>
    %cst_19 = arith.constant dense<0.000000e+00> : vector<64xf32>
    %28 = vector.multi_reduction <add>, %27, %cst_19 [1] : vector<64x128xf32> to vector<64xf32>
    %29 = vector.shape_cast %28 : vector<64xf32> to vector<64x1xf32>
    %30 = math.log %29 : vector<64x1xf32>
    %31 = vector.broadcast %30 : vector<64x1xf32> to vector<64x128xf32>
    %32 = arith.subf %26, %31 : vector<64x128xf32>
    %c0_20 = arith.constant 0 : index
    %c0_21 = arith.constant 0 : index
    %33 = vector.load %arg6[%c0_20, %c0_21] : memref<64x128xf32, #tpu.memory_space<vmem>>, vector<64x128xf32>
    tpu.vector_store %arg6[%c0_20, %c0_21], %32 {strides = array<i32>} : memref<64x128xf32, #tpu.memory_space<vmem>>, vector<64x128xf32>,
    return
  }
}

</mosaic_0001>

<llo_original>
// kernel: tpu_custom_call.1
$region0: #{tpu_custom_call.1}
  #allocation0 [shape = 'u32[]', space=smem, size = 0x4, offset = 0x4, fixed_abs, tag = 'smem constant byte address 0x4 - core index']
  #allocation1 [shape = 'u32[72,128]{1,0:T(1,128)}', space=vmem, size = 0x9000, scoped, tag = 'internal scratch']
  %s0 = inlined_call_operand.vmem [shape: bf16[64,64], index: 0, kind: input, shape index: {}]
  %s1 = inlined_call_operand.vmem [shape: bf16[64,4], index: 1, kind: input, shape index: {}]
  %s2 = inlined_call_operand.hbm [shape: f32[4,32], index: 2, kind: input, shape index: {}]
  %s3 = inlined_call_operand.vmem [shape: f32[1,32], index: 3, kind: input, shape index: {}]
  %s4 = inlined_call_operand.hbm [shape: f32[32,128], index: 4, kind: input, shape index: {}]
  %s5 = inlined_call_operand.vmem [shape: f32[1,128], index: 5, kind: input, shape index: {}]
  %s6 = inlined_call_operand.hbm [shape: f32[64,128], index: 6, kind: output, shape index: {}]
  %s7 = sld [smem:[#allocation0]]
  $region42: #{tpu_custom_call.1} parent=0
    _
  %s9 = ssub.s32 1, %s7
  %s10 = scalar_select 0, %s9, %s7
  $region1: #{tpu_custom_call.1} parent=0
    #allocation2 [shape = 'u8[2048]{0}', space=vmem, size = 0x800, scoped, tag = 'input window, operand 2, single buffered']
    #allocation3 [shape = 's32[1]{0}', space=sflag, size = 0x4, scoped, tag = 'scoped memory for tpu_custom_call.1']
    #allocation4 [shape = 's32[1]{0}', space=sflag, size = 0x4, scoped, tag = 'scoped memory for tpu_custom_call.1']
    #allocation5 [shape = 'u8[16384]{0}', space=vmem, size = 0x4000, scoped, tag = 'input window, operand 4, single buffered']
    #allocation6 [shape = 's32[1]{0}', space=sflag, size = 0x4, scoped, tag = 'scoped memory for tpu_custom_call.1']
    #allocation7 [shape = 'u8[32768]{0}', space=vmem, size = 0x8000, scoped, tag = 'output window, operand 0, single buffered']
    %11 = vsyncpa [#allocation3], 0
    %12 = vsyncpa [#allocation6], 0
    %13 = vsyncpa [#allocation4], 0
    // Predicated region
    $region2: #{tpu_custom_call.1} parent=1 // pred_check
      _
    $region3: #{tpu_custom_call.1} parent=1 // pred_check_branch
      %15 = sbr.rel (0) target = $region5
    $region4: #{tpu_custom_call.1} parent=1 // pred_region
      _
    $region5: #{tpu_custom_call.1} parent=1 // pred_fallthru
      _
    // Predicated region
    $region6: #{tpu_custom_call.1} parent=1 // pred_check
      _
    $region7: #{tpu_custom_call.1} parent=1 // pred_check_branch
      %17 = sbr.rel (0) target = $region9
    $region8: #{tpu_custom_call.1} parent=1 // pred_region
      _
    $region9: #{tpu_custom_call.1} parent=1 // pred_fallthru
      _
    // Predicated region
    $region10: #{tpu_custom_call.1} parent=1 // pred_check
      _
    $region11: #{tpu_custom_call.1} parent=1 // pred_check_branch
      %19 = sbr.rel (0) target = $region13
    $region12: #{tpu_custom_call.1} parent=1 // pred_region
      %21 = vsyncadd [#allocation3], 0
      %s23 = sshll.u32 %s2, 4
      %s24 = int_to_ptr.hbm [resolvable:$true] %s23
      %s25 = sshll.u32 [#allocation2], 4
      %s26 = int_to_ptr.vmem [resolvable:$true] %s25
      %28 = dma.hbm_to_vmem [thread:$0]  %s24, 64, %s26, [#allocation3]
    $region13: #{tpu_custom_call.1} parent=1 // pred_fallthru
      _
    // Predicated region
    $region14: #{tpu_custom_call.1} parent=1 // pred_check
      _
    $region15: #{tpu_custom_call.1} parent=1 // pred_check_branch
      %30 = sbr.rel (0) target = $region17
    $region16: #{tpu_custom_call.1} parent=1 // pred_region
      _
    $region17: #{tpu_custom_call.1} parent=1 // pred_fallthru
      _
    // Predicated region
    $region18: #{tpu_custom_call.1} parent=1 // pred_check
      _
    $region19: #{tpu_custom_call.1} parent=1 // pred_check_branch
      %32 = sbr.rel (0) target = $region21
    $region20: #{tpu_custom_call.1} parent=1 // pred_region
      %34 = vsyncadd [#allocation6], 0
      %s35 = sshll.u32 %s4, 4
      %s36 = int_to_ptr.hbm [resolvable:$true] %s35
      %s37 = sshll.u32 [#allocation5], 4
      %s38 = int_to_ptr.vmem [resolvable:$true] %s37
      %43 = dma.hbm_to_vmem [thread:$0]  %s36, 512, %s38, [#allocation6], 128, 128, 8
    $region21: #{tpu_custom_call.1} parent=1 // pred_fallthru
      _
    // Predicated region
    $region22: #{tpu_custom_call.1} parent=1 // pred_check
      _
    $region23: #{tpu_custom_call.1} parent=1 // pred_check_branch
      %45 = sbr.rel (0) target = $region25
    $region24: #{tpu_custom_call.1} parent=1 // pred_region
      _
    $region25: #{tpu_custom_call.1} parent=1 // pred_fallthru
      _
    // Predicated region
    $region26: #{tpu_custom_call.1} parent=1 // pred_check
      _
    $region27: #{tpu_custom_call.1} parent=1 // pred_check_branch
      %47 = sbr.rel (0) target = $region29
    $region28: #{tpu_custom_call.1} parent=1 // pred_region
      %49 = dma.done [#allocation3], 64
    $region29: #{tpu_custom_call.1} parent=1 // pred_fallthru
      _
    // Predicated region
    $region30: #{tpu_custom_call.1} parent=1 // pred_check
      _
    $region31: #{tpu_custom_call.1} parent=1 // pred_check_branch
      %51 = sbr.rel (0) target = $region33
    $region32: #{tpu_custom_call.1} parent=1 // pred_region
      %53 = dma.done [#allocation6], 512
    $region33: #{tpu_custom_call.1} parent=1 // pred_fallthru
      _
    %v55 = vld [vmem:[%s0] sm:$0xf]
    %v56 = vld [vmem:[%s0 + $0x4] sm:$0xf]
    %v57 = vld [vmem:[%s0 + $0x8] sm:$0xf]
    %v58 = vld [vmem:[%s0 + $0xc] sm:$0xf]
    %v59 = vld [vmem:[%s0 + $0x10] sm:$0xf]
    %v60 = vld [vmem:[%s0 + $0x14] sm:$0xf]
    %v61 = vld [vmem:[%s0 + $0x18] sm:$0xf]
    %v62 = vld [vmem:[%s0 + $0x1c] sm:$0xf]
    %v63 = vld [vmem:[%s1] sm:$0xf]
    %v64 = vld [vmem:[%s1 + $0x4] sm:$0xf]
    %v65 = vld [vmem:[%s1 + $0x8] sm:$0xf]
    %v66 = vld [vmem:[%s1 + $0xc] sm:$0xf]
    %v67 = vld [vmem:[%s1 + $0x10] sm:$0xf]
    %v68 = vld [vmem:[%s1 + $0x14] sm:$0xf]
    %v69 = vld [vmem:[%s1 + $0x18] sm:$0xf]
    %v70 = vld [vmem:[%s1 + $0x1c] sm:$0xf]
    %v79 = vunpack.c.l.b16 %v55
    %v80 = vunpack.c.l.b16 %v56
    %v81 = vunpack.c.l.b16 %v57
    %v82 = vunpack.c.l.b16 %v58
    %v83 = vunpack.c.l.b16 %v59
    %v84 = vunpack.c.l.b16 %v60
    %v85 = vunpack.c.l.b16 %v61
    %v86 = vunpack.c.l.b16 %v62
    %v87 = vpack.c.b16 %v80, %v79
    %v88 = vpack.c.b16 %v82, %v81
    %v89 = vpack.c.b16 %v84, %v83
    %v90 = vpack.c.b16 %v86, %v85
    %v99 = vunpack.c.l.b16 %v63
    %v100 = vunpack.c.l.b16 %v64
    %v101 = vunpack.c.l.b16 %v65
    %v102 = vunpack.c.l.b16 %v66
    %v103 = vunpack.c.l.b16 %v67
    %v104 = vunpack.c.l.b16 %v68
    %v105 = vunpack.c.l.b16 %v69
    %v106 = vunpack.c.l.b16 %v70
    %v107 = vpack.c.b16 %v100, %v99
    %v108 = vpack.c.b16 %v102, %v101
    %v109 = vpack.c.b16 %v104, %v103
    %v110 = vpack.c.b16 %v106, %v105
    %vm115 = vcmask 523264
    %v117 = vsel %vm115, %v87, 0
    %v120 = vsel %vm115, %v88, 0
    %v123 = vsel %vm115, %v89, 0
    %v126 = vsel %vm115, %v90, 0
    %128 = vmatpush.bf16.msra.mxu0 0
    %129 = vmatpush.bf16.msra.mxu0 0
    %130 = vmatpush.bf16.msra.mxu0 0
    %131 = vmatpush.bf16.msra.mxu0 0
    %132 = vmatpush.bf16.msra.mxu0 %v110
    %133 = vmatpush.bf16.msra.mxu0 %v109
    %134 = vmatpush.bf16.msra.mxu0 %v108
    %135 = vmatpush.bf16.msra.mxu0 %v107
    %136 = vmatmul.bf16.gmra.mxu0 %v117
    %v137 = vpop.f32.mrf.mxu0
    %v138 = vadd.f32 0.0, %v137
    %v139 = vpop.f32.mrf.mxu0
    %v140 = vadd.f32 0.0, %v139
    %141 = vmatmul.bf16.gmra.mxu0 %v120
    %v142 = vpop.f32.mrf.mxu0
    %v143 = vadd.f32 0.0, %v142
    %v144 = vpop.f32.mrf.mxu0
    %v145 = vadd.f32 0.0, %v144
    %146 = vmatmul.bf16.gmra.mxu0 %v123
    %v147 = vpop.f32.mrf.mxu0
    %v148 = vadd.f32 0.0, %v147
    %v149 = vpop.f32.mrf.mxu0
    %v150 = vadd.f32 0.0, %v149
    %151 = vmatmul.bf16.gmra.mxu0 %v126
    %v152 = vpop.f32.mrf.mxu0
    %v153 = vadd.f32 0.0, %v152
    %v154 = vpop.f32.mrf.mxu0
    %v155 = vadd.f32 0.0, %v154
    %156 = vdwg.mxu0
    %v157 = vld [vmem:[#allocation2] sm:$0xf]
    %v158 = vld [vmem:[%s3] sm:$0x1]
    %v160 = vperm.slane %v158, 0
    %vm162 = vcmask 31744
    %v164 = vsel %vm162, %v138, 0
    %v167 = vsel %vm162, %v140, 0
    %v170 = vsel %vm162, %v143, 0
    %v173 = vsel %vm162, %v145, 0
    %v176 = vsel %vm162, %v148, 0
    %v179 = vsel %vm162, %v150, 0
    %v182 = vsel %vm162, %v153, 0
    %v185 = vsel %vm162, %v155, 0
    %vm187 = vcmask 1043456
    %v189 = vsel %vm187, %v157, 0
    %191 = vmatpush.msra.mxu0 0.0
    %192 = vmatpush.msra.mxu0 0.0
    %193 = vmatpush.msra.mxu0 0.0
    %194 = vmatpush.msra.mxu0 0.0
    %195 = vmatpush.msra.mxu0 0.0
    %196 = vmatpush.msra.mxu0 0.0
    %197 = vmatpush.msra.mxu0 0.0
    %198 = vmatpush.msra.mxu0 0.0
    %199 = vmatpush.msra.mxu0 0.0
    %200 = vmatpush.msra.mxu0 0.0
    %201 = vmatpush.msra.mxu0 0.0
    %202 = vmatpush.msra.mxu0 0.0
    %203 = vmatpush.msra.mxu0 0.0
    %204 = vmatpush.msra.mxu0 0.0
    %205 = vmatpush.msra.mxu0 0.0
    %206 = vmatpush.msra.mxu0 %v189
    %207 = vmatmul.f32.gmra.mxu0 %v164
    %v208 = vpop.f32.mrf.mxu0
    %v209 = vadd.f32 %v160, %v208
    %210 = vmatmul.f32.gmra.mxu0 %v167
    %v211 = vpop.f32.mrf.mxu0
    %v212 = vadd.f32 %v160, %v211
    %213 = vmatmul.f32.gmra.mxu0 %v170
    %v214 = vpop.f32.mrf.mxu0
    %v215 = vadd.f32 %v160, %v214
    %216 = vmatmul.f32.gmra.mxu0 %v173
    %v217 = vpop.f32.mrf.mxu0
    %v218 = vadd.f32 %v160, %v217
    %219 = vmatmul.f32.gmra.mxu0 %v176
    %v220 = vpop.f32.mrf.mxu0
    %v221 = vadd.f32 %v160, %v220
    %222 = vmatmul.f32.gmra.mxu0 %v179
    %v223 = vpop.f32.mrf.mxu0
    %v224 = vadd.f32 %v160, %v223
    %225 = vmatmul.f32.gmra.mxu0 %v182
    %v226 = vpop.f32.mrf.mxu0
    %v227 = vadd.f32 %v160, %v226
    %228 = vmatmul.f32.gmra.mxu0 %v185
    %v229 = vpop.f32.mrf.mxu0
    %v230 = vadd.f32 %v160, %v229
    %231 = vdwg.mxu0
    %v232 = vmax.f32 %v209, 0.0
    %v233 = vmax.f32 %v212, 0.0
    %v234 = vmax.f32 %v215, 0.0
    %v235 = vmax.f32 %v218, 0.0
    %v236 = vmax.f32 %v221, 0.0
    %v237 = vmax.f32 %v224, 0.0
    %v238 = vmax.f32 %v227, 0.0
    %v239 = vmax.f32 %v230, 0.0
    %v240 = vld [vmem:[#allocation5] sm:$0xff]
    %v241 = vld [vmem:[#allocation5 + $0x8] sm:$0xff]
    %v242 = vld [vmem:[#allocation5 + $0x10] sm:$0xff]
    %v243 = vld [vmem:[#allocation5 + $0x18] sm:$0xff]
    %vm244 = vcmask 261120
    %v246 = vsel %vm244, %v232, 0
    %v249 = vsel %vm244, %v233, 0
    %v252 = vsel %vm244, %v234, 0
    %v255 = vsel %vm244, %v235, 0
    %v258 = vsel %vm244, %v236, 0
    %v261 = vsel %vm244, %v237, 0
    %v264 = vsel %vm244, %v238, 0
    %v267 = vsel %vm244, %v239, 0
    %269 = vmatpush.msra.mxu0 0.0
    %270 = vmatpush.msra.mxu0 0.0
    %271 = vmatpush.msra.mxu0 0.0
    %272 = vmatpush.msra.mxu0 0.0
    %273 = vmatpush.msra.mxu0 0.0
    %274 = vmatpush.msra.mxu0 0.0
    %275 = vmatpush.msra.mxu0 0.0
    %276 = vmatpush.msra.mxu0 0.0
    %277 = vmatpush.msra.mxu0 0.0
    %278 = vmatpush.msra.mxu0 0.0
    %279 = vmatpush.msra.mxu0 0.0
    %280 = vmatpush.msra.mxu0 0.0
    %281 = vmatpush.msra.mxu0 %v243
    %282 = vmatpush.msra.mxu0 %v242
    %283 = vmatpush.msra.mxu0 %v241
    %284 = vmatpush.msra.mxu0 %v240
    %285 = vmatmul.f32.gmra.mxu0 %v246
    %v286 = vpop.f32.mrf.mxu0
    %v287 = vadd.f32 0.0, %v286
    %288 = vmatmul.f32.gmra.mxu0 %v249
    %v289 = vpop.f32.mrf.mxu0
    %v290 = vadd.f32 0.0, %v289
    %291 = vmatmul.f32.gmra.mxu0 %v252
    %v292 = vpop.f32.mrf.mxu0
    %v293 = vadd.f32 0.0, %v292
    %294 = vmatmul.f32.gmra.mxu0 %v255
    %v295 = vpop.f32.mrf.mxu0
    %v296 = vadd.f32 0.0, %v295
    %297 = vmatmul.f32.gmra.mxu0 %v258
    %v298 = vpop.f32.mrf.mxu0
    %v299 = vadd.f32 0.0, %v298
    %300 = vmatmul.f32.gmra.mxu0 %v261
    %v301 = vpop.f32.mrf.mxu0
    %v302 = vadd.f32 0.0, %v301
    %303 = vmatmul.f32.gmra.mxu0 %v264
    %v304 = vpop.f32.mrf.mxu0
    %v305 = vadd.f32 0.0, %v304
    %306 = vmatmul.f32.gmra.mxu0 %v267
    %v307 = vpop.f32.mrf.mxu0
    %v308 = vadd.f32 0.0, %v307
    %309 = vdwg.mxu0
    %v310 = vpack.c.bf16 %v290, %v287
    %v311 = vpack.c.bf16 %v296, %v293
    %v312 = vpack.c.bf16 %v302, %v299
    %v313 = vpack.c.bf16 %v308, %v305
    %v314 = vld [vmem:[%s5] sm:$0x1]
    %v316 = vperm.slane %v314, 0
    %318 = vmatpush.bf16.msra.mxu0 0
    %319 = vmatpush.bf16.msra.mxu0 0
    %320 = vmatpush.bf16.msra.mxu0 0
    %321 = vmatpush.bf16.msra.mxu0 0
    %322 = vmatpush.bf16.msra.mxu0 %v313
    %323 = vmatpush.bf16.msra.mxu0 %v312
    %324 = vmatpush.bf16.msra.mxu0 %v311
    %325 = vmatpush.bf16.msra.mxu0 %v310
    %326 = vmatmul.bf16.gmra.mxu0 %v117
    %v327 = vpop.f32.mrf.mxu0
    %v328 = vadd.f32 %v316, %v327
    %v329 = vpop.f32.mrf.mxu0
    %v330 = vadd.f32 %v316, %v329
    %331 = vmatmul.bf16.gmra.mxu0 %v120
    %v332 = vpop.f32.mrf.mxu0
    %v333 = vadd.f32 %v316, %v332
    %v334 = vpop.f32.mrf.mxu0
    %v335 = vadd.f32 %v316, %v334
    %336 = vmatmul.bf16.gmra.mxu0 %v123
    %v337 = vpop.f32.mrf.mxu0
    %v338 = vadd.f32 %v316, %v337
    %v339 = vpop.f32.mrf.mxu0
    %v340 = vadd.f32 %v316, %v339
    %341 = vmatmul.bf16.gmra.mxu0 %v126
    %v342 = vpop.f32.mrf.mxu0
    %v343 = vadd.f32 %v316, %v342
    %v344 = vpop.f32.mrf.mxu0
    %v345 = vadd.f32 %v316, %v344
    %346 = vdwg.mxu0
    %v347 = vlaneseq
    %v348 = vand.u32 %v347, 127
    %vm349 = vcmp.lt.s32.totalorder %v348, 4
    %v350 = vsel %vm349, %v328, -1e+30
    %v351 = vsel %vm349, %v330, -1e+30
    %v352 = vsel %vm349, %v333, -1e+30
    %v353 = vsel %vm349, %v335, -1e+30
    %v354 = vsel %vm349, %v338, -1e+30
    %v355 = vsel %vm349, %v340, -1e+30
    %v356 = vsel %vm349, %v343, -1e+30
    %v357 = vsel %vm349, %v345, -1e+30
    %358 = vmax.xlane.f32.xlu0 %v350
    %v359 = vpop.xlane.xlu0 %358
    %360 = vmax.xlane.f32.xlu0 %v351
    %v361 = vpop.xlane.xlu0 %360
    %362 = vmax.xlane.f32.xlu0 %v352
    %v363 = vpop.xlane.xlu0 %362
    %364 = vmax.xlane.f32.xlu0 %v353
    %v365 = vpop.xlane.xlu0 %364
    %366 = vmax.xlane.f32.xlu0 %v354
    %v367 = vpop.xlane.xlu0 %366
    %368 = vmax.xlane.f32.xlu0 %v355
    %v369 = vpop.xlane.xlu0 %368
    %370 = vmax.xlane.f32.xlu0 %v356
    %v371 = vpop.xlane.xlu0 %370
    %372 = vmax.xlane.f32.xlu0 %v357
    %v373 = vpop.xlane.xlu0 %372
    %v374 = vsub.f32 %v350, %v359
    %v375 = vsub.f32 %v351, %v361
    %v376 = vsub.f32 %v352, %v363
    %v377 = vsub.f32 %v353, %v365
    %v378 = vsub.f32 %v354, %v367
    %v379 = vsub.f32 %v355, %v369
    %v380 = vsub.f32 %v356, %v371
    %v381 = vsub.f32 %v357, %v373
    %v382 = vmul.f32 %v374, 1.442695
    %v383 = vpow.pop %v382
    %v384 = vmul.f32 %v375, 1.442695
    %v385 = vpow.pop %v384
    %v386 = vmul.f32 %v376, 1.442695
    %v387 = vpow.pop %v386
    %v388 = vmul.f32 %v377, 1.442695
    %v389 = vpow.pop %v388
    %v390 = vmul.f32 %v378, 1.442695
    %v391 = vpow.pop %v390
    %v392 = vmul.f32 %v379, 1.442695
    %v393 = vpow.pop %v392
    %v394 = vmul.f32 %v380, 1.442695
    %v395 = vpow.pop %v394
    %v396 = vmul.f32 %v381, 1.442695
    %v397 = vpow.pop %v396
    %398 = vadd.xlane.f32.xlu0 %v383
    %v399 = vpop.xlane.xlu0 %398
    %400 = vadd.xlane.f32.xlu0 %v385
    %v401 = vpop.xlane.xlu0 %400
    %402 = vadd.xlane.f32.xlu0 %v387
    %v403 = vpop.xlane.xlu0 %402
    %404 = vadd.xlane.f32.xlu0 %v389
    %v405 = vpop.xlane.xlu0 %404
    %406 = vadd.xlane.f32.xlu0 %v391
    %v407 = vpop.xlane.xlu0 %406
    %408 = vadd.xlane.f32.xlu0 %v393
    %v409 = vpop.xlane.xlu0 %408
    %410 = vadd.xlane.f32.xlu0 %v395
    %v411 = vpop.xlane.xlu0 %410
    %412 = vadd.xlane.f32.xlu0 %v397
    %v413 = vpop.xlane.xlu0 %412
    %v414 = vlog2.pop %v399
    %v415 = vmul.f32 %v414, 0.6931472
    %v416 = vlog2.pop %v401
    %v417 = vmul.f32 %v416, 0.6931472
    %v418 = vlog2.pop %v403
    %v419 = vmul.f32 %v418, 0.6931472
    %v420 = vlog2.pop %v405
    %v421 = vmul.f32 %v420, 0.6931472
    %v422 = vlog2.pop %v407
    %v423 = vmul.f32 %v422, 0.6931472
    %v424 = vlog2.pop %v409
    %v425 = vmul.f32 %v424, 0.6931472
    %v426 = vlog2.pop %v411
    %v427 = vmul.f32 %v426, 0.6931472
    %v428 = vlog2.pop %v413
    %v429 = vmul.f32 %v428, 0.6931472
    %v430 = vsub.f32 %v374, %v415
    %v431 = vsub.f32 %v375, %v417
    %v432 = vsub.f32 %v376, %v419
    %v433 = vsub.f32 %v377, %v421
    %v434 = vsub.f32 %v378, %v423
    %v435 = vsub.f32 %v379, %v425
    %v436 = vsub.f32 %v380, %v427
    %v437 = vsub.f32 %v381, %v429
    %438 = vst [vmem:[#allocation7] sm:$0xff] %v430
    %439 = vst [vmem:[#allocation7 + $0x8] sm:$0xff] %v431
    %440 = vst [vmem:[#allocation7 + $0x10] sm:$0xff] %v432
    %441 = vst [vmem:[#allocation7 + $0x18] sm:$0xff] %v433
    %442 = vst [vmem:[#allocation7 + $0x20] sm:$0xff] %v434
    %443 = vst [vmem:[#allocation7 + $0x28] sm:$0xff] %v435
    %444 = vst [vmem:[#allocation7 + $0x30] sm:$0xff] %v436
    %445 = vst [vmem:[#allocation7 + $0x38] sm:$0xff] %v437
    // Predicated region
    $region34: #{tpu_custom_call.1} parent=1 // pred_check
      _
    $region35: #{tpu_custom_call.1} parent=1 // pred_check_branch
      %447 = sbr.rel (0) target = $region37
    $region36: #{tpu_custom_call.1} parent=1 // pred_region
      %449 = vsyncadd [#allocation4], 0
      %s450 = sshll.u32 [#allocation7], 4
      %s451 = int_to_ptr.vmem [resolvable:$true] %s450
      %s452 = sshll.u32 %s6, 4
      %s453 = int_to_ptr.hbm [resolvable:$true] %s452
      %458 = dma.vmem_to_hbm [thread:$0]  %s451, 1024, %s453, [#allocation4], 128, 128, 8
    $region37: #{tpu_custom_call.1} parent=1 // pred_fallthru
      _
    // Predicated region
    $region38: #{tpu_custom_call.1} parent=1 // pred_check
      _
    $region39: #{tpu_custom_call.1} parent=1 // pred_check_branch
      %460 = sbr.rel (0) target = $region41
    $region40: #{tpu_custom_call.1} parent=1 // pred_region
      %462 = dma.done [#allocation4], 1024
    $region41: #{tpu_custom_call.1} parent=1 // pred_fallthru
      _
    %463 = vsyncpa [#allocation3], 1
    %464 = vsyncpa [#allocation6], 1
    %465 = vsyncpa [#allocation4], 1

</llo_original>
